<compile_context>
chip_gen: v7x
topology: tpu7x:2x2x1
jax: 0.10.0
libtpu: 0.0.40
codegen_flags: <defaults>
</compile_context>

<pallas_src>
import jax
import jax.numpy as jnp
from jax.experimental import pallas as pl
from jax.experimental.pallas import tpu as pltpu

EPS = 1e-08


def _make_kernel(has_mask, need_tail_mask, hw_valid, r_rows, j_split, j_total,
                 acc_rows):
    """Builds the kernel body (with or without a mask input ref)."""

    def kernel(*refs):
        if has_mask:
            pred_ref, tgt_ref, mask_ref, out_ref, acc_ref = refs
        else:
            pred_ref, tgt_ref, out_ref, acc_ref = refs
            mask_ref = None

        p_idx = pl.program_id(1)   # pixel-axis core split (size P)
        j = pl.program_id(2)       # sequential pixel-tile index within split

        @pl.when(j == 0)
        def _init():
            acc_ref[...] = jnp.zeros_like(acc_ref)

        # forward: x = (x - 0.5) * 2, optionally multiplied by mask
        p = (pred_ref[...].astype(jnp.float32) - 0.5) * 2.0   # (C, R, 128)
        t = (tgt_ref[...].astype(jnp.float32) - 0.5) * 2.0    # (C, R, 128)
        if mask_ref is not None:
            m = mask_ref[...].astype(jnp.float32)             # (Cm, R, 128)
            p = p * m                                         # broadcasts over C
            t = t * m

        # criterion: 1 - <p,t>_C / ||p+eps|| / ||t+eps||   (per pixel)
        dot = jnp.sum(p * t, axis=0)                          # (R, 128)
        pe = p + EPS
        te = t + EPS
        sp = jnp.sum(pe * pe, axis=0)                         # (R, 128)
        st = jnp.sum(te * te, axis=0)                         # (R, 128)
        per_pixel = 1.0 - dot * jax.lax.rsqrt(sp * st)        # (R, 128)

        def reduce_rows(x):
            # (R,128) -> (acc_rows,128) with pure vreg-wise VPU adds.
            if acc_rows == r_rows:
                return x
            return jnp.sum(x.reshape(r_rows // acc_rows, acc_rows, 128), axis=0)

        if need_tail_mask:
            g = p_idx * j_split + j            # global pixel-tile index
            is_tail = g == (j_total - 1)

            @pl.when(jnp.logical_not(is_tail))
            def _acc_full():
                acc_ref[...] += reduce_rows(per_pixel)

            @pl.when(is_tail)
            def _acc_tail():
                # zero out padded / out-of-range pixels of the ragged last tile
                row = jax.lax.broadcasted_iota(jnp.int32, per_pixel.shape, 0)
                lane = jax.lax.broadcasted_iota(jnp.int32, per_pixel.shape, 1)
                pix = (g * r_rows + row) * 128 + lane
                acc_ref[...] += reduce_rows(
                    jnp.where(pix < hw_valid, per_pixel, 0.0))
        else:
            acc_ref[...] += reduce_rows(per_pixel)

        @pl.when(j == pl.num_programs(2) - 1)
        def _finalize():
            out_ref[...] = jnp.sum(acc_ref[...], axis=0, keepdims=True)

    return kernel


def normal_loss(normal, ground_truth, mask=None, *, r_blk=2048):
    """Pallas implementation of normal_loss.forward (NCHW inputs)."""
    N, C, H, W = normal.shape
    HW = H * W

    pad = (-HW) % 128
    HWp = HW + pad
    HW128 = HWp // 128  # number of 128-lane pixel rows per image

    def prep(x):
        # NCHW -> (N, C, HW) -> (N, C, HW128, 128): pure reshapes (+ tail pad
        # of the last axis only in the rare case HW % 128 != 0).
        x = x.reshape(x.shape[0], x.shape[1], HW)
        if pad:
            x = jnp.pad(x, ((0, 0), (0, 0), (0, pad)))
        return x.reshape(x.shape[0], x.shape[1], HW128, 128)

    pred = prep(normal)
    tgt = prep(ground_truth)

    has_mask = mask is not None
    if has_mask:
        msk = jnp.asarray(mask)
        while msk.ndim < 4:          # torch-style trailing-dim broadcast
            msk = msk[None]
        Nm, Cm, Hm, Wm = msk.shape
        if (Hm, Wm) != (H, W):       # rare: spatial broadcast must materialize
            msk = jnp.broadcast_to(msk, (Nm, Cm, H, W))
        # stream at 32-bit to keep the (8,128) sublane tiling; batch/channel
        # broadcast handled via index_map / in-kernel broadcast, NOT by
        # materializing an (N, C, H, W) mask in HBM.
        msk = prep(msk.astype(jnp.float32))
    else:
        msk = None
        Nm = Cm = 0

    # ---- pick R (pixel rows per tile): balanced and VMEM-budgeted ---------
    VMEM_BUDGET = 24 * 1024 * 1024          # headroom under 32 MiB scoped VMEM
    chans = 2 * C + (Cm if has_mask else 0)
    bytes_per_row = chans * 2 * 128 * 4      # double-buffered, f32
    r_cap = max(8, (VMEM_BUDGET // bytes_per_row) // 8 * 8)
    r_max = max(8, (min(r_blk, r_cap) // 8) * 8)

    if HW128 <= r_max:
        R = HW128
        J = 1
    else:
        # Prefer a multiple-of-8 R that divides HW128 exactly (no ragged tile,
        # no garbage-row DMA on the last step).
        R = 0
        for cand in range(r_max, max(8, r_max // 2) - 1, -8):
            if HW128 % cand == 0:
                R = cand
                break
        if R == 0:
            # Balanced tiles: split as evenly as possible, round rows up to 8.
            J0 = -(-HW128 // r_max)
            R = -(-HW128 // J0)
            R = min(r_max, -(-R // 8) * 8)
        J = -(-HW128 // R)

    need_tail_mask = (pad != 0) or (J * R != HW128)
    acc_rows = 8 if (R % 8 == 0) else R

    # ---- optional size-2 split of the pixel-tile axis (v7x megacore) ------
    if (N % 2 == 1) and (J >= 2) and (J % 2 == 0):
        P = 2
    else:
        P = 1
    Jp = J // P

    def in_map(n, pp, j):
        return (n, 0, pp * Jp + j, 0)

    in_specs = [
        pl.BlockSpec((None, C, R, 128), in_map),
        pl.BlockSpec((None, C, R, 128), in_map),
    ]
    args = [pred, tgt]

    if has_mask:
        if Nm == 1:
            mask_map = lambda n, pp, j: (0, 0, pp * Jp + j, 0)
        else:
            mask_map = in_map
        in_specs.append(pl.BlockSpec((None, Cm, R, 128), mask_map))
        args.append(msk)

    kernel = _make_kernel(has_mask, need_tail_mask, HW, R, Jp, J, acc_rows)

    partials = pl.pallas_call(
        kernel,
        out_shape=jax.ShapeDtypeStruct((N, P, 1, 128), jnp.float32),
        grid=(N, P, Jp),
        in_specs=in_specs,
        out_specs=pl.BlockSpec((None, None, 1, 128),
                               lambda n, pp, j: (n, pp, 0, 0)),
        scratch_shapes=[pltpu.VMEM((acc_rows, 128), jnp.float32)],
        compiler_params=pltpu.CompilerParams(
            dimension_semantics=("parallel", "parallel", "arbitrary"),
            vmem_limit_bytes=32 * 1024 * 1024),
    )(*args)

    return jnp.sum(partials) / (N * HW)


def _normal_loss_ref(normal, ground_truth, mask=None):
    """Pure-JAX reference mirroring the PyTorch module."""
    normal = (normal - 0.5) * 2.0
    ground_truth = (ground_truth - 0.5) * 2.0
    if mask is not None:
        normal = normal * mask
        ground_truth = ground_truth * mask
    dot = jnp.sum(normal * ground_truth, axis=1)
    n_p = jnp.sqrt(jnp.sum((normal + EPS) ** 2, axis=1))
    n_t = jnp.sqrt(jnp.sum((ground_truth + EPS) ** 2, axis=1))
    return jnp.mean(1.0 - dot / n_p / n_t)


if __name__ == "__main__":
    key = jax.random.PRNGKey(0)
    k1, k2, k3, k4, k5, k6, k7 = jax.random.split(key, 7)

    # NCHW: batch=2, channels=3 (surface normals), spatial=16x16
    normal = jax.random.uniform(k1, (2, 3, 16, 16), dtype=jnp.float32)
    ground_truth = jax.random.uniform(k2, (2, 3, 16, 16), dtype=jnp.float32)

    # mask=None path (matches the default forward call)
    loss = jax.block_until_ready(normal_loss(normal, ground_truth))
    ref = _normal_loss_ref(normal, ground_truth)
    assert jnp.allclose(loss, ref, atol=1e-5), (loss, ref)

    # masked path (mask broadcast over channels inside the kernel)
    mask = (jax.random.uniform(k3, (2, 1, 16, 16)) > 0.3).astype(jnp.float32)
    loss_m = jax.block_until_ready(normal_loss(normal, ground_truth, mask))
    ref_m = _normal_loss_ref(normal, ground_truth, mask)
    assert jnp.allclose(loss_m, ref_m, atol=1e-5), (loss_m, ref_m)

    # ragged spatial size (H*W not a multiple of 128) exercises the tail mask
    n_r = jax.random.uniform(k4, (1, 3, 10, 10), dtype=jnp.float32)
    g_r = jax.random.uniform(k5, (1, 3, 10, 10), dtype=jnp.float32)
    loss_r = jax.block_until_ready(normal_loss(n_r, g_r))
    ref_r = _normal_loss_ref(n_r, g_r)
    assert jnp.allclose(loss_r, ref_r, atol=1e-5), (loss_r, ref_r)

    # multi-tile accumulation + ragged last tile (HW128=36, r_blk=8 -> R=8,J=5)
    n_t = jax.random.uniform(k6, (1, 3, 48, 96), dtype=jnp.float32)
    g_t = jax.random.uniform(k7, (1, 3, 48, 96), dtype=jnp.float32)
    loss_t = jax.block_until_ready(normal_loss(n_t, g_t, r_blk=8))
    ref_t = _normal_loss_ref(n_t, g_t)
    assert jnp.allclose(loss_t, ref_t, atol=1e-4), (loss_t, ref_t)

    # exact multi-tile split with the size-2 pixel-axis core split
    # (HW128=32, r_blk=8 -> R=8, J=4, N=1 -> P=2)
    n_s = jax.random.uniform(k6, (1, 3, 64, 64), dtype=jnp.float32)
    g_s = jax.random.uniform(k7, (1, 3, 64, 64), dtype=jnp.float32)
    loss_s = jax.block_until_ready(normal_loss(n_s, g_s, r_blk=8))
    ref_s = _normal_loss_ref(n_s, g_s)
    assert jnp.allclose(loss_s, ref_s, atol=1e-4), (loss_s, ref_s)

    print("KERNEL_OK")
</pallas_src>

<mosaic_0001>
module attributes {stable_mosaic.version = 11 : i64} {
  func.func @kernel(%arg0: i32, %arg1: i32, %arg2: i32, %arg3: memref<1x3x2x128xf32, #tpu.memory_space<vmem>>, %arg4: memref<1x3x2x128xf32, #tpu.memory_space<vmem>>, %arg5: memref<1x1x1x128xf32, #tpu.memory_space<vmem>>, %arg6: memref<2x128xf32, #tpu.memory_space<vmem>>) attributes {dimension_semantics = [#tpu.dimension_semantics<parallel>, #tpu.dimension_semantics<parallel>, #tpu.dimension_semantics<arbitrary>], iteration_bounds = array<i64: 2, 1, 1>, scalar_prefetch = 0 : i64, scratch_operands = 1 : i64, tpu.core_type = #tpu.core_type<tc>, window_params = [{transform_indices = @transform_0, window_bounds = array<i64: 1, 3, 2, 128>}, {transform_indices = @transform_1, window_bounds = array<i64: 1, 3, 2, 128>}, {transform_indices = @transform_2, window_bounds = array<i64: 1, 1, 1, 128>}]} {
    %c0_i32 = arith.constant 0 : i32
    %0 = arith.cmpi eq, %arg2, %c0_i32 : i32
    %1 = arith.extui %0 : i1 to i32
    %c0_i32_0 = arith.constant 0 : i32
    %2 = arith.cmpi ne, %1, %c0_i32_0 : i32
    scf.if %2 {
      %cst_23 = arith.constant 0.000000e+00 : f32
      %36 = vector.broadcast %cst_23 : f32 to vector<2x128xf32>
      %c0_24 = arith.constant 0 : index
      %c0_25 = arith.constant 0 : index
      %37 = vector.load %arg6[%c0_24, %c0_25] : memref<2x128xf32, #tpu.memory_space<vmem>>, vector<2x128xf32>
      tpu.vector_store %arg6[%c0_24, %c0_25], %36 {strides = array<i32>} : memref<2x128xf32, #tpu.memory_space<vmem>>, vector<2x128xf32>,
    } else {
    }
    %c0 = arith.constant 0 : index
    %c0_1 = arith.constant 0 : index
    %c0_2 = arith.constant 0 : index
    %c0_3 = arith.constant 0 : index
    %3 = vector.load %arg3[%c0, %c0_1, %c0_2, %c0_3] : memref<1x3x2x128xf32, #tpu.memory_space<vmem>>, vector<1x3x2x128xf32>
    %4 = vector.shape_cast %3 : vector<1x3x2x128xf32> to vector<3x2x128xf32>
    %cst = arith.constant 5.000000e-01 : f32
    %5 = vector.broadcast %cst : f32 to vector<3x2x128xf32>
    %6 = arith.subf %4, %5 : vector<3x2x128xf32>
    %cst_4 = arith.constant 2.000000e+00 : f32
    %7 = vector.broadcast %cst_4 : f32 to vector<3x2x128xf32>
    %8 = arith.mulf %6, %7 : vector<3x2x128xf32>
    %c0_5 = arith.constant 0 : index
    %c0_6 = arith.constant 0 : index
    %c0_7 = arith.constant 0 : index
    %c0_8 = arith.constant 0 : index
    %9 = vector.load %arg4[%c0_5, %c0_6, %c0_7, %c0_8] : memref<1x3x2x128xf32, #tpu.memory_space<vmem>>, vector<1x3x2x128xf32>
    %10 = vector.shape_cast %9 : vector<1x3x2x128xf32> to vector<3x2x128xf32>
    %cst_9 = arith.constant 5.000000e-01 : f32
    %11 = vector.broadcast %cst_9 : f32 to vector<3x2x128xf32>
    %12 = arith.subf %10, %11 : vector<3x2x128xf32>
    %cst_10 = arith.constant 2.000000e+00 : f32
    %13 = vector.broadcast %cst_10 : f32 to vector<3x2x128xf32>
    %14 = arith.mulf %12, %13 : vector<3x2x128xf32>
    %15 = arith.mulf %8, %14 : vector<3x2x128xf32>
    %cst_11 = arith.constant dense<0.000000e+00> : vector<2x128xf32>
    %16 = vector.multi_reduction <add>, %15, %cst_11 [0] : vector<3x2x128xf32> to vector<2x128xf32>
    %cst_12 = arith.constant 9.99999993E-9 : f32
    %17 = vector.broadcast %cst_12 : f32 to vector<3x2x128xf32>
    %18 = arith.addf %8, %17 : vector<3x2x128xf32>
    %cst_13 = arith.constant 9.99999993E-9 : f32
    %19 = vector.broadcast %cst_13 : f32 to vector<3x2x128xf32>
    %20 = arith.addf %14, %19 : vector<3x2x128xf32>
    %21 = arith.mulf %18, %18 : vector<3x2x128xf32>
    %cst_14 = arith.constant dense<0.000000e+00> : vector<2x128xf32>
    %22 = vector.multi_reduction <add>, %21, %cst_14 [0] : vector<3x2x128xf32> to vector<2x128xf32>
    %23 = arith.mulf %20, %20 : vector<3x2x128xf32>
    %cst_15 = arith.constant dense<0.000000e+00> : vector<2x128xf32>
    %24 = vector.multi_reduction <add>, %23, %cst_15 [0] : vector<3x2x128xf32> to vector<2x128xf32>
    %25 = arith.mulf %22, %24 : vector<2x128xf32>
    %26 = math.rsqrt %25 : vector<2x128xf32>
    %27 = arith.mulf %16, %26 : vector<2x128xf32>
    %cst_16 = arith.constant 1.000000e+00 : f32
    %28 = vector.broadcast %cst_16 : f32 to vector<2x128xf32>
    %29 = arith.subf %28, %27 : vector<2x128xf32>
    %c0_17 = arith.constant 0 : index
    %c0_18 = arith.constant 0 : index
    %30 = vector.load %arg6[%c0_17, %c0_18] : memref<2x128xf32, #tpu.memory_space<vmem>>, vector<2x128xf32>
    %31 = arith.addf %30, %29 : vector<2x128xf32>
    %c0_19 = arith.constant 0 : index
    %c0_20 = arith.constant 0 : index
    %32 = vector.load %arg6[%c0_19, %c0_20] : memref<2x128xf32, #tpu.memory_space<vmem>>, vector<2x128xf32>
    tpu.vector_store %arg6[%c0_19, %c0_20], %31 {strides = array<i32>} : memref<2x128xf32, #tpu.memory_space<vmem>>, vector<2x128xf32>,
    %c0_i32_21 = arith.constant 0 : i32
    %33 = arith.cmpi eq, %arg2, %c0_i32_21 : i32
    %34 = arith.extui %33 : i1 to i32
    %c0_i32_22 = arith.constant 0 : i32
    %35 = arith.cmpi ne, %34, %c0_i32_22 : i32
    scf.if %35 {
      %c0_23 = arith.constant 0 : index
      %c0_24 = arith.constant 0 : index
      %36 = vector.load %arg6[%c0_23, %c0_24] : memref<2x128xf32, #tpu.memory_space<vmem>>, vector<2x128xf32>
      %cst_25 = arith.constant dense<0.000000e+00> : vector<128xf32>
      %37 = vector.multi_reduction <add>, %36, %cst_25 [0] : vector<2x128xf32> to vector<128xf32>
      %38 = vector.shape_cast %37 : vector<128xf32> to vector<1x128xf32>
      %c0_26 = arith.constant 0 : index
      %c0_27 = arith.constant 0 : index
      %c0_28 = arith.constant 0 : index
      %c0_29 = arith.constant 0 : index
      %39 = vector.load %arg5[%c0_26, %c0_27, %c0_28, %c0_29] : memref<1x1x1x128xf32, #tpu.memory_space<vmem>>, vector<1x1x1x128xf32>
      %40 = vector.shape_cast %39 : vector<1x1x1x128xf32> to vector<1x128xf32>
      %41 = vector.shape_cast %38 : vector<1x128xf32> to vector<1x1x1x128xf32>
      tpu.vector_store %arg5[%c0_26, %c0_27, %c0_28, %c0_29], %41 {strides = array<i32>} : memref<1x1x1x128xf32, #tpu.memory_space<vmem>>, vector<1x1x1x128xf32>,
    } else {
    }
    return
  }
  func.func @transform_0(%arg0: i32, %arg1: i32, %arg2: i32) -> (i32, i32, i32, i32) {
    %c1_i32 = arith.constant 1 : i32
    %0 = arith.muli %arg1, %c1_i32 : i32
    %1 = arith.addi %0, %arg2 : i32
    %c0_i32 = arith.constant 0 : i32
    %c0_i32_0 = arith.constant 0 : i32
    %c0_i32_1 = arith.constant 0 : i32
    return %arg0, %c0_i32, %1, %c0_i32_0 : i32, i32, i32, i32
  }
  func.func @transform_1(%arg0: i32, %arg1: i32, %arg2: i32) -> (i32, i32, i32, i32) {
    %c1_i32 = arith.constant 1 : i32
    %0 = arith.muli %arg1, %c1_i32 : i32
    %1 = arith.addi %0, %arg2 : i32
    %c0_i32 = arith.constant 0 : i32
    %c0_i32_0 = arith.constant 0 : i32
    %c0_i32_1 = arith.constant 0 : i32
    return %arg0, %c0_i32, %1, %c0_i32_0 : i32, i32, i32, i32
  }
  func.func @transform_2(%arg0: i32, %arg1: i32, %arg2: i32) -> (i32, i32, i32, i32) {
    %c0_i32 = arith.constant 0 : i32
    %c0_i32_0 = arith.constant 0 : i32
    %c0_i32_1 = arith.constant 0 : i32
    return %arg0, %arg1, %c0_i32, %c0_i32_0 : i32, i32, i32, i32
  }
}

</mosaic_0001>

<llo_original>
// kernel: tpu_custom_call.1
$region0: #{tpu_custom_call.1}
  #allocation0 [shape = 'u32[]', space=smem, size = 0x4, offset = 0x4, fixed_abs, tag = 'smem constant byte address 0x4 - core index']
  #allocation1 [shape = 'u32[144,128]{1,0:T(1,128)}', space=vmem, size = 0x12000, scoped, tag = 'internal scratch']
  #allocation2 [shape = 'f32[2,128]{1,0:T(2,128)}', space=vmem, size = 0x400, scoped, tag = 'scratch operand']
  %s0 = inlined_call_operand.hbm [shape: f32[2,3,2,128], index: 0, kind: input, shape index: {}]
  %s1 = inlined_call_operand.hbm [shape: f32[2,3,2,128], index: 1, kind: input, shape index: {}]
  %s2 = inlined_call_operand.hbm [shape: f32[2,1,1,128], index: 2, kind: output, shape index: {}]
  %s3 = sld [smem:[#allocation0]]
  $region57: #{tpu_custom_call.1} parent=0
    _
  %s5 = ssub.s32 1, %s3
  %s6 = scalar_select 0, %s5, %s3
  $region1: #{tpu_custom_call.1} parent=0
    #allocation3 [shape = 'u8[6144]{0}', space=vmem, size = 0x1800, scoped, tag = 'input window, operand 0']
    #allocation4 [shape = 's32[2]{0}', space=sflag, size = 0x8, scoped, tag = 'scoped memory for tpu_custom_call.1']
    #allocation5 [shape = 's32[2]{0}', space=sflag, size = 0x8, scoped, tag = 'scoped memory for tpu_custom_call.1']
    #allocation6 [shape = 'u8[6144]{0}', space=vmem, size = 0x1800, scoped, tag = 'input window, operand 1']
    #allocation7 [shape = 's32[2]{0}', space=sflag, size = 0x8, scoped, tag = 'scoped memory for tpu_custom_call.1']
    #allocation8 [shape = 'u8[1024]{0}', space=vmem, size = 0x400, scoped, tag = 'output window, operand 0']
    %7 = vsyncpa [#allocation4], 0
    %s8 = scalar_lea.sflag [#allocation4], 1
    %9 = vsyncpa %s8, 0
    %10 = vsyncpa [#allocation7], 0
    %s11 = scalar_lea.sflag [#allocation7], 1
    %12 = vsyncpa %s11, 0
    %13 = vsyncpa [#allocation5], 0
    %s14 = scalar_lea.sflag [#allocation5], 1
    %15 = vsyncpa %s14, 0
    loop: start=0, step=1, limit=4
    $region2: #{tpu_custom_call.1} parent=1 // loop_pre_header
      _
    $region3: #{tpu_custom_call.1} parent=1 // loop_header
      %s17 = sphi 0, %s21
      %p18 = scmp.ge.s32.totalorder %s17, 4
      %s24 = sphi 0, %s43
      %s25 = sphi 0, %s39
      %s26 = sphi 0, %s35
      %s27 = sphi 0, %s24
      %s28 = sphi 0, %s25
      %s29 = sphi 0, %s26
      %s30 = sphi 0, %s27
      %s31 = sphi 0, %s28
      %s32 = sphi 0, %s29
      %s50 = sphi 0, %s52
      %s53 = sphi 0, %s50
      %s54 = sphi 0, %s53
      %s70 = sphi 0, %s54
      %s80 = sphi 0, %s82
      %s83 = sphi 0, %s80
      %s84 = sphi 0, %s83
      %s100 = sphi 0, %s84
      %s108 = sphi 0, %s110
      %s111 = sphi 0, %s108
      %s112 = sphi 0, %s111
      %s128 = sphi 0, %s112
    $region4: #{tpu_custom_call.1} parent=1 // loop_header_branch
      %20 = sbr.rel (%p18) target = $region8
    $region5: #{tpu_custom_call.1} parent=1 // loop_body
      %s22 = ssub.s32 %s17, 1
      %s23 = ssub.s32 %s17, 2
      %s33 = sadd.s32 1, %s26
      %p34 = scmp.ge.s32.totalorder %s33, 1
      %s35 = scalar_select %p34, 0, %s33
      %s36 = sadd.s32 1, %s25
      %s37 = scalar_select %p34, %s36, %s25
      %p38 = scmp.ge.s32.totalorder %s37, 1
      %s39 = scalar_select %p38, 0, %s37
      %s40 = sadd.s32 1, %s24
      %s41 = scalar_select %p38, %s40, %s24
      %p42 = scmp.ge.s32.totalorder %s41, 2
      %s43 = scalar_select %p42, 0, %s41
      %s44 = sadd.s32 %s25, %s26
      %s45 = sadd.s32 %s39, %s35
      %s46 = ssub.s32 %s24, %s43
      %s47 = ssub.s32 %s44, %s45
      %s48 = sor.u32 %s46, %s47
      %p49 = scmp.eq.s32.totalorder %s48, 0
      %s51 = sadd.s32 %s50, 1
      %s52 = scalar_select %p49, %s50, %s51
      %p55 = pneg %p49
      %p56 = scmp.eq.s32.totalorder %s17, 1
      %p57 = por %p55, %p56
      %p58 = scmp.ne.s32.totalorder %s50, %s53
      %p59 = scmp.eq.s32.totalorder %s17, 0
      %p60 = por %p58, %p59
      %p61 = scmp.ne.s32.totalorder %s50, %s53
      %p62 = scmp.eq.s32.totalorder %s22, 1
      %p63 = por %p61, %p62
      %p64 = scmp.ne.s32.totalorder %s53, %s54
      %p65 = scmp.eq.s32.totalorder %s22, 0
      %p66 = por %p64, %p65
      %p67 = scmp.ne.s32.totalorder %s53, %s54
      %p68 = scmp.eq.s32.totalorder %s23, 1
      %p69 = por %p67, %p68
      %p71 = scmp.ne.s32.totalorder %s54, %s70
      %p72 = scmp.eq.s32.totalorder %s23, 0
      %p73 = por %p71, %p72
      %s74 = sadd.s32 %s25, %s26
      %s75 = sadd.s32 %s39, %s35
      %s76 = ssub.s32 %s24, %s43
      %s77 = ssub.s32 %s74, %s75
      %s78 = sor.u32 %s76, %s77
      %p79 = scmp.eq.s32.totalorder %s78, 0
      %s81 = sadd.s32 %s80, 1
      %s82 = scalar_select %p79, %s80, %s81
      %p85 = pneg %p79
      %p86 = scmp.eq.s32.totalorder %s17, 1
      %p87 = por %p85, %p86
      %p88 = scmp.ne.s32.totalorder %s80, %s83
      %p89 = scmp.eq.s32.totalorder %s17, 0
      %p90 = por %p88, %p89
      %p91 = scmp.ne.s32.totalorder %s80, %s83
      %p92 = scmp.eq.s32.totalorder %s22, 1
      %p93 = por %p91, %p92
      %p94 = scmp.ne.s32.totalorder %s83, %s84
      %p95 = scmp.eq.s32.totalorder %s22, 0
      %p96 = por %p94, %p95
      %p97 = scmp.ne.s32.totalorder %s83, %s84
      %p98 = scmp.eq.s32.totalorder %s23, 1
      %p99 = por %p97, %p98
      %p101 = scmp.ne.s32.totalorder %s84, %s100
      %p102 = scmp.eq.s32.totalorder %s23, 0
      %p103 = por %p101, %p102
      %s104 = ssub.s32 %s24, %s43
      %s105 = ssub.s32 %s25, %s39
      %s106 = sor.u32 %s104, %s105
      %p107 = scmp.eq.s32.totalorder %s106, 0
      %s109 = sadd.s32 %s108, 1
      %s110 = scalar_select %p107, %s108, %s109
      %p113 = pneg %p107
      %p114 = scmp.eq.s32.totalorder %s17, 1
      %p115 = por %p113, %p114
      %p116 = scmp.ne.s32.totalorder %s108, %s111
      %p117 = scmp.eq.s32.totalorder %s17, 0
      %p118 = por %p116, %p117
      %p119 = scmp.ne.s32.totalorder %s108, %s111
      %p120 = scmp.eq.s32.totalorder %s22, 1
      %p121 = por %p119, %p120
      %p122 = scmp.ne.s32.totalorder %s111, %s112
      %p123 = scmp.eq.s32.totalorder %s22, 0
      %p124 = por %p122, %p123
      %p125 = scmp.ne.s32.totalorder %s111, %s112
      %p126 = scmp.eq.s32.totalorder %s23, 1
      %p127 = por %p125, %p126
      %p129 = scmp.ne.s32.totalorder %s112, %s128
      %p130 = scmp.eq.s32.totalorder %s23, 0
      %p131 = por %p129, %p130
      %p132 = scmp.le.s32.totalorder 1, %s17
      %p133 = scmp.lt.s32.totalorder %s17, 3
      %p134 = pnand %p132, %p133
      %p135 = pneg %p134
      // Predicated region
      $region9: #{tpu_custom_call.1} parent=5 // pred_check
        _
      $region10: #{tpu_custom_call.1} parent=5 // pred_check_branch
        %137 = sbr.rel (%p134) target = $region12
      $region11: #{tpu_custom_call.1} parent=5 // pred_region
        %s138 = ssub.s32 %s17, 1
      $region12: #{tpu_custom_call.1} parent=5 // pred_fallthru
        _
      %p139 = scmp.lt.s32.totalorder %s17, 2
      // Predicated region
      $region13: #{tpu_custom_call.1} parent=5 // pred_check
        %p140 = pneg %p139
      $region14: #{tpu_custom_call.1} parent=5 // pred_check_branch
        %142 = sbr.rel (%p140) target = $region16
      $region15: #{tpu_custom_call.1} parent=5 // pred_region
        // Predicated region
        $region17: #{tpu_custom_call.1} parent=15 // pred_check
          %p143 = pneg %p60
        $region18: #{tpu_custom_call.1} parent=15 // pred_check_branch
          %145 = sbr.rel (%p143) target = $region20
        $region19: #{tpu_custom_call.1} parent=15 // pred_region
          %s146 = sand.u32 %s50, 1
          %s147 = scalar_lea.sflag [#allocation4], %s146
          %s148 = sand.u32 %s50, 1
          %s149 = smul.addr %s148, 6
          %s150 = scalar_lea.vmem [#allocation3], %s149
          %s151 = sadd.s32 %s25, %s26
          %s153 = ssub.s32 96, 96
          %154 = vsyncadd %s147, %s153
          %s155 = smul.addr %s24, 3
          %s156 = sadd.s32 %s151, %s155
          %s157 = smul.addr %s156, 32
          %s158 = scalar_lea.hbm %s0, %s157
          %s159 = sshll.u32 %s150, 4
          %s160 = int_to_ptr.vmem [resolvable:$true] %s159
          %165 = dma.hbm_to_vmem [thread:$0]  %s158, 96, %s160, %s147, 32, 32, 2
        $region20: #{tpu_custom_call.1} parent=15 // pred_fallthru
          _
        // Predicated region
        $region21: #{tpu_custom_call.1} parent=15 // pred_check
          %p166 = pneg %p90
        $region22: #{tpu_custom_call.1} parent=15 // pred_check_branch
          %168 = sbr.rel (%p166) target = $region24
        $region23: #{tpu_custom_call.1} parent=15 // pred_region
          %s169 = sand.u32 %s80, 1
          %s170 = scalar_lea.sflag [#allocation7], %s169
          %s171 = sand.u32 %s80, 1
          %s172 = smul.addr %s171, 6
          %s173 = scalar_lea.vmem [#allocation6], %s172
          %s174 = sadd.s32 %s25, %s26
          %s176 = ssub.s32 96, 96
          %177 = vsyncadd %s170, %s176
          %s178 = smul.addr %s24, 3
          %s179 = sadd.s32 %s174, %s178
          %s180 = smul.addr %s179, 32
          %s181 = scalar_lea.hbm %s1, %s180
          %s182 = sshll.u32 %s173, 4
          %s183 = int_to_ptr.vmem [resolvable:$true] %s182
          %188 = dma.hbm_to_vmem [thread:$0]  %s181, 96, %s183, %s170, 32, 32, 2
        $region24: #{tpu_custom_call.1} parent=15 // pred_fallthru
          _
      $region16: #{tpu_custom_call.1} parent=5 // pred_fallthru
        _
      %p189 = scmp.le.s32.totalorder 1, %s17
      %p190 = scmp.lt.s32.totalorder %s17, 3
      %p191 = pnand %p189, %p190
      %p192 = pneg %p191
      // Predicated region
      $region25: #{tpu_custom_call.1} parent=5 // pred_check
        _
      $region26: #{tpu_custom_call.1} parent=5 // pred_check_branch
        %194 = sbr.rel (%p191) target = $region28
      $region27: #{tpu_custom_call.1} parent=5 // pred_region
        %s195 = ssub.s32 %s17, 1
        %s196 = sand.u32 %s53, 1
        %s197 = scalar_lea.sflag [#allocation4], %s196
        %s198 = sand.u32 %s53, 1
        %s199 = smul.addr %s198, 6
        %s200 = scalar_lea.vmem [#allocation3], %s199
        // Predicated region
        $region29: #{tpu_custom_call.1} parent=27 // pred_check
          %p201 = pneg %p66
        $region30: #{tpu_custom_call.1} parent=27 // pred_check_branch
          %203 = sbr.rel (%p201) target = $region32
        $region31: #{tpu_custom_call.1} parent=27 // pred_region
          %204 = dma.done %s197, 96
        $region32: #{tpu_custom_call.1} parent=27 // pred_fallthru
          _
        %s205 = sand.u32 %s83, 1
        %s206 = scalar_lea.sflag [#allocation7], %s205
        %s207 = sand.u32 %s83, 1
        %s208 = smul.addr %s207, 6
        %s209 = scalar_lea.vmem [#allocation6], %s208
        // Predicated region
        $region33: #{tpu_custom_call.1} parent=27 // pred_check
          %p210 = pneg %p96
        $region34: #{tpu_custom_call.1} parent=27 // pred_check_branch
          %212 = sbr.rel (%p210) target = $region36
        $region35: #{tpu_custom_call.1} parent=27 // pred_region
          %213 = dma.done %s206, 96
        $region36: #{tpu_custom_call.1} parent=27 // pred_fallthru
          _
        %s214 = sand.u32 %s53, 1
        %s215 = scalar_lea.sflag [#allocation4], %s214
        %s216 = sand.u32 %s53, 1
        %s217 = smul.addr %s216, 6
        %s218 = scalar_lea.vmem [#allocation3], %s217
        %p219 = pneg %p66
        %p220 = pneg %p63
        %s221 = sand.u32 %s83, 1
        %s222 = scalar_lea.sflag [#allocation7], %s221
        %s223 = sand.u32 %s83, 1
        %s224 = smul.addr %s223, 6
        %s225 = scalar_lea.vmem [#allocation6], %s224
        %p226 = pneg %p96
        %p227 = pneg %p93
        %p228 = pneg %p124
        %p229 = pneg %p121
        %s230 = sand.u32 %s111, 1
        %s231 = scalar_lea.sflag [#allocation5], %s230
        %s232 = sand.u32 %s111, 1
        %s233 = scalar_lea.vmem [#allocation8], %s232
        %s234 = sadd.s32 %s28, %s29
        %s235 = sadd.s32 %s28, %s29
        %p236 = scmp.eq.s32.totalorder %s29, 0
        // Predicated region
        $region37: #{tpu_custom_call.1} parent=27 // pred_check
          %p237 = pneg %p236
        $region38: #{tpu_custom_call.1} parent=27 // pred_check_branch
          %239 = sbr.rel (%p237) target = $region40
        $region39: #{tpu_custom_call.1} parent=27 // pred_region
          %240 = vst [vmem:[#allocation2] sm:$0x3] 0.0
        $region40: #{tpu_custom_call.1} parent=27 // pred_fallthru
          _
        %v241 = vld [vmem:[%s200] sm:$0x3]
        %v242 = vld [vmem:[%s200 + $0x2] sm:$0x3]
        %v243 = vld [vmem:[%s200 + $0x4] sm:$0x3]
        %v244 = vsub.f32 %v241, 0.5
        %v245 = vsub.f32 %v242, 0.5
        %v246 = vsub.f32 %v243, 0.5
        %v247 = vmul.f32 %v244, 2.0
        %v248 = vmul.f32 %v245, 2.0
        %v249 = vmul.f32 %v246, 2.0
        %v250 = vld [vmem:[%s209] sm:$0x3]
        %v251 = vld [vmem:[%s209 + $0x2] sm:$0x3]
        %v252 = vld [vmem:[%s209 + $0x4] sm:$0x3]
        %v253 = vsub.f32 %v250, 0.5
        %v254 = vsub.f32 %v251, 0.5
        %v255 = vsub.f32 %v252, 0.5
        %v256 = vmul.f32 %v253, 2.0
        %v257 = vmul.f32 %v254, 2.0
        %v258 = vmul.f32 %v255, 2.0
        %v259 = vmul.f32 %v247, %v256
        %v260 = vmul.f32 %v248, %v257
        %v261 = vmul.f32 %v249, %v258
        %vm262 = vcmask 1041408
        %v263 = vsel %vm262, %v259, 0.0
        %v264 = vsel %vm262, %v260, 0.0
        %v265 = vadd.f32 %v263, %v264
        %v266 = vsel %vm262, %v261, 0.0
        %v267 = vadd.f32 %v265, %v266
        %v268 = vadd.f32 %v247, 1e-08
        %v269 = vadd.f32 %v248, 1e-08
        %v270 = vadd.f32 %v249, 1e-08
        %v271 = vadd.f32 %v256, 1e-08
        %v272 = vadd.f32 %v257, 1e-08
        %v273 = vadd.f32 %v258, 1e-08
        %v274 = vmul.f32 %v268, %v268
        %v275 = vmul.f32 %v269, %v269
        %v276 = vmul.f32 %v270, %v270
        %v277 = vsel %vm262, %v274, 0.0
        %v278 = vsel %vm262, %v275, 0.0
        %v279 = vadd.f32 %v277, %v278
        %v280 = vsel %vm262, %v276, 0.0
        %v281 = vadd.f32 %v279, %v280
        %v282 = vmul.f32 %v271, %v271
        %v283 = vmul.f32 %v272, %v272
        %v284 = vmul.f32 %v273, %v273
        %v285 = vsel %vm262, %v282, 0.0
        %v286 = vsel %vm262, %v283, 0.0
        %v287 = vadd.f32 %v285, %v286
        %v288 = vsel %vm262, %v284, 0.0
        %v289 = vadd.f32 %v287, %v288
        %v290 = vmul.f32 %v281, %v289
        %v291 = vrsqrt.pop %v290
        %v292 = vmul.f32 %v267, %v291
        %v293 = vsub.f32 1.0, %v292
        %v294 = vld [vmem:[#allocation2] sm:$0x3]
        %v295 = vadd.f32 %v294, %v293
        %296 = vst [vmem:[#allocation2] sm:$0x3] %v295
        // Predicated region
        $region41: #{tpu_custom_call.1} parent=27 // pred_check
          %p297 = pneg %p236
        $region42: #{tpu_custom_call.1} parent=27 // pred_check_branch
          %299 = sbr.rel (%p297) target = $region44
        $region43: #{tpu_custom_call.1} parent=27 // pred_region
          %v300 = vld [vmem:[#allocation2] sm:$0x3]
          %v301 = vsel %vm262, %v300, 0.0
          %v302 = vrot.slane %v301, 4
          %v303 = vadd.f32 %v301, %v302
          %v304 = vrot.slane %v303, 2
          %v305 = vadd.f32 %v303, %v304
          %v306 = vrot.slane %v305, 1
          %v307 = vadd.f32 %v305, %v306
          %308 = vst [vmem:[%s233] sm:$0x1] %v307
        $region44: #{tpu_custom_call.1} parent=27 // pred_fallthru
          _
        %s309 = sand.u32 %s111, 1
        %s310 = scalar_lea.sflag [#allocation5], %s309
        %s311 = sand.u32 %s111, 1
        %s312 = scalar_lea.vmem [#allocation8], %s311
        // Predicated region
        $region45: #{tpu_custom_call.1} parent=27 // pred_check
          %p313 = pneg %p121
        $region46: #{tpu_custom_call.1} parent=27 // pred_check_branch
          %315 = sbr.rel (%p313) target = $region48
        $region47: #{tpu_custom_call.1} parent=27 // pred_region
          %s317 = ssub.s32 16, 16
          %318 = vsyncadd %s310, %s317
          %s319 = sadd.s32 %s28, %s27
          %s320 = smul.addr %s319, 16
          %s321 = scalar_lea.hbm %s2, %s320
          %s323 = sshll.u32 %s312, 4
          %s324 = int_to_ptr.vmem [resolvable:$true] %s323
          %326 = dma.vmem_to_hbm [thread:$0]  %s324, 16, %s321, %s310
        $region48: #{tpu_custom_call.1} parent=27 // pred_fallthru
          _
      $region28: #{tpu_custom_call.1} parent=5 // pred_fallthru
        _
      %p327 = scmp.le.s32.totalorder 2, %s17
      // Predicated region
      $region49: #{tpu_custom_call.1} parent=5 // pred_check
        %p328 = pneg %p327
      $region50: #{tpu_custom_call.1} parent=5 // pred_check_branch
        %330 = sbr.rel (%p328) target = $region52
      $region51: #{tpu_custom_call.1} parent=5 // pred_region
        %s331 = ssub.s32 %s17, 2
        // Predicated region
        $region53: #{tpu_custom_call.1} parent=51 // pred_check
          %p332 = pneg %p127
        $region54: #{tpu_custom_call.1} parent=51 // pred_check_branch
          %334 = sbr.rel (%p332) target = $region56
        $region55: #{tpu_custom_call.1} parent=51 // pred_region
          %s335 = sand.u32 %s112, 1
          %s336 = scalar_lea.sflag [#allocation5], %s335
          %s337 = sand.u32 %s112, 1
          %s338 = scalar_lea.vmem [#allocation8], %s337
          %339 = dma.done %s336, 16
        $region56: #{tpu_custom_call.1} parent=51 // pred_fallthru
          _
      $region52: #{tpu_custom_call.1} parent=5 // pred_fallthru
        _
    $region6: #{tpu_custom_call.1} parent=1 // loop_footer
      %s21 = sadd.s32 1, %s17
    $region7: #{tpu_custom_call.1} parent=1 // loop_footer_branch
      %16 = sbr.rel target = $region3
    $region8: #{tpu_custom_call.1} parent=1 // loop_exit
      _
    %340 = vsyncpa [#allocation4], 1
    %s341 = scalar_lea.sflag [#allocation4], 1
    %342 = vsyncpa %s341, 1
    %343 = vsyncpa [#allocation7], 1
    %s344 = scalar_lea.sflag [#allocation7], 1
    %345 = vsyncpa %s344, 1
    %346 = vsyncpa [#allocation5], 1
    %s347 = scalar_lea.sflag [#allocation5], 1
    %348 = vsyncpa %s347, 1

</llo_original>
